<compile_context>
chip_gen: v5e
topology: v5e:2x2
jax: 0.10.0
libtpu: 0.0.40
codegen_flags: <defaults>
</compile_context>

<pallas_src>
import functools

import jax
import jax.numpy as jnp
from jax.experimental import pallas as pl
from jax.experimental.pallas import tpu as pltpu


def _head_kernel(f1_ref, f2_ref, w_ref, b_ref, xy_ref, sp_ref):
    # TODO(synk): nn.Dropout omitted — module evaluated in eval/inference mode (identity).
    w = w_ref[...]                                   # (D, H), resident across the grid
    b = b_ref[...]                                   # (1, H)

    x = jnp.tanh(jnp.dot(f1_ref[...], w, preferred_element_type=jnp.float32) + b)  # (T, H)
    y = jnp.tanh(jnp.dot(f2_ref[...], w, preferred_element_type=jnp.float32) + b)  # (T, H)

    # Lane-packed [x | y] slab: columns [0:H] = x, [H:2H] = y (one wide store per tile).
    xy_ref[...] = jnp.concatenate([x, y], axis=-1).astype(xy_ref.dtype)

    # Row-wise inner product + sigmoid, emitted lane-dense: row 0 = sim, row 1 = prob.
    sim = jnp.sum(x * y, axis=-1)                    # (T,)
    prob = jax.nn.sigmoid(sim)
    sp_ref[...] = jnp.stack([sim, prob], axis=0).astype(sp_ref.dtype)


@functools.partial(jax.jit, static_argnames=("tile_n",))
def vecsim_classification_head(features_1, features_2, weight, bias, *, tile_n=4096):
    """features_*: (N, D_in) f32; weight: (H, D_in) (PyTorch layout); bias: (H,)."""
    n, d_in = features_1.shape
    h = weight.shape[0]

    # One-time layout prep outside the kernel (no per-invocation XLU transpose).
    w_t = weight.T                      # (D_in, H)
    bias2d = bias.reshape(1, h)

    # VMEM-aware tile cap: per-row bytes for f1+f2 inputs, [x|y] output and sim/prob,
    # double-buffered.  Budget of 12 MiB keeps us under the smallest scoped-VMEM
    # default (v5e: 16 MiB) with headroom for weights/intermediates.
    per_row_bytes = 4 * (2 * d_in + 2 * h + 2)
    vmem_budget = 12 * 1024 * 1024
    t_cap = max(128, (vmem_budget // (2 * per_row_bytes)) // 128 * 128)
    tile = min(tile_n, t_cap)

    if n <= tile:
        # Single full-extent block: legal for any N, no padding needed.
        t, grid_n = n, 1
    else:
        # t is a multiple of 128 (and 8), so block-shape rules are satisfied; the
        # last block may overhang the array and Pallas masks the out-of-bounds rows.
        t = tile
        grid_n = pl.cdiv(n, t)

    cost = pl.CostEstimate(
        flops=4 * n * d_in * h + 4 * n * h,
        transcendentals=2 * n * h + n,
        bytes_accessed=(2 * n * d_in + d_in * h + h + 2 * n * h + 2 * n) * 4,
    )

    xy, sp = pl.pallas_call(
        _head_kernel,
        out_shape=(
            jax.ShapeDtypeStruct((n, 2 * h), jnp.float32),   # [x | y] lane-packed slab
            jax.ShapeDtypeStruct((2, n), jnp.float32),       # row 0 = sim, row 1 = prob
        ),
        grid_spec=pltpu.PrefetchScalarGridSpec(
            num_scalar_prefetch=0,
            grid=(grid_n,),
            in_specs=[
                pl.BlockSpec((t, d_in), lambda i: (i, 0)),   # features_1 tile
                pl.BlockSpec((t, d_in), lambda i: (i, 0)),   # features_2 tile
                pl.BlockSpec((d_in, h), lambda i: (0, 0)),   # full weight (resident)
                pl.BlockSpec((1, h), lambda i: (0, 0)),      # full bias (resident)
            ],
            out_specs=(
                pl.BlockSpec((t, 2 * h), lambda i: (i, 0)),
                pl.BlockSpec((2, t), lambda i: (0, i)),
            ),
        ),
        compiler_params=pltpu.CompilerParams(
            dimension_semantics=("parallel",),   # megacore-shard the batch axis (v7x)
        ),
        cost_estimate=cost,
    )(features_1, features_2, w_t, bias2d)

    x = xy[:, :h]
    y = xy[:, h:]
    sim = sp[0]
    prob = sp[1]
    return x, y, sim, prob


def _reference(features_1, features_2, weight, bias):
    x = jnp.tanh(features_1 @ weight.T + bias)
    y = jnp.tanh(features_2 @ weight.T + bias)
    sim = jnp.sum(x * y, axis=-1)
    prob = jax.nn.sigmoid(sim)
    return x, y, sim, prob


if __name__ == "__main__":
    # Config: hidden_size=32, cls_layers='-1,-2' (length=2, concat pool),
    # similarity_measure='inner_product'  =>  dense: 64 -> 32.
    hidden_size = 32
    length = 2
    d_in = hidden_size * length
    batch = 8

    key = jax.random.PRNGKey(0)
    k1, k2, kw, kb = jax.random.split(key, 4)
    features_1 = jax.random.normal(k1, (batch, d_in), dtype=jnp.float32)
    features_2 = jax.random.normal(k2, (batch, d_in), dtype=jnp.float32)
    bound = 1.0 / jnp.sqrt(d_in)
    weight = jax.random.uniform(kw, (hidden_size, d_in), jnp.float32, -bound, bound)
    bias = jax.random.uniform(kb, (hidden_size,), jnp.float32, -bound, bound)

    outs = vecsim_classification_head(features_1, features_2, weight, bias)
    outs = jax.block_until_ready(outs)

    refs = _reference(features_1, features_2, weight, bias)
    for o, r in zip(outs, refs):
        assert o.shape == r.shape, (o.shape, r.shape)
        assert jnp.allclose(o, r, atol=1e-5, rtol=1e-5)

    print("KERNEL_OK")
</pallas_src>

<mosaic_0001>
module attributes {stable_mosaic.version = 11 : i64} {
  func.func @_head_kernel(%arg0: i32, %arg1: memref<8x64xf32, #tpu.memory_space<vmem>>, %arg2: memref<8x64xf32, #tpu.memory_space<vmem>>, %arg3: memref<64x32xf32, #tpu.memory_space<vmem>>, %arg4: memref<1x32xf32, #tpu.memory_space<vmem>>, %arg5: memref<8x64xf32, #tpu.memory_space<vmem>>, %arg6: memref<2x8xf32, #tpu.memory_space<vmem>>) attributes {dimension_semantics = [#tpu.dimension_semantics<parallel>], iteration_bounds = array<i64: 1>, scalar_prefetch = 0 : i64, scratch_operands = 0 : i64, tpu.core_type = #tpu.core_type<tc>, window_params = [{transform_indices = @transform_0, window_bounds = array<i64: 8, 64>}, {transform_indices = @transform_1, window_bounds = array<i64: 8, 64>}, {pipeline_mode = #tpu.pipeline_mode<synchronous>, transform_indices = @transform_2, window_bounds = array<i64: 64, 32>}, {pipeline_mode = #tpu.pipeline_mode<synchronous>, transform_indices = @transform_3, window_bounds = array<i64: 1, 32>}, {transform_indices = @transform_4, window_bounds = array<i64: 8, 64>}, {transform_indices = @transform_5, window_bounds = array<i64: 2, 8>}]} {
    %c0 = arith.constant 0 : index
    %c0_0 = arith.constant 0 : index
    %0 = vector.load %arg3[%c0, %c0_0] : memref<64x32xf32, #tpu.memory_space<vmem>>, vector<64x32xf32>
    %c0_1 = arith.constant 0 : index
    %c0_2 = arith.constant 0 : index
    %1 = vector.load %arg4[%c0_1, %c0_2] : memref<1x32xf32, #tpu.memory_space<vmem>>, vector<1x32xf32>
    %c0_3 = arith.constant 0 : index
    %c0_4 = arith.constant 0 : index
    %2 = vector.load %arg1[%c0_3, %c0_4] : memref<8x64xf32, #tpu.memory_space<vmem>>, vector<8x64xf32>
    %cst = arith.constant dense<0.000000e+00> : vector<8x32xf32>
    %3 = tpu.matmul %2, %0, %cst {dimension_numbers = #tpu.dot_dimension_numbers<[1], [0], [0], [1], [0, 0, 1, 1], [], []>} : vector<8x64xf32>, vector<64x32xf32>, vector<8x32xf32> -> vector<8x32xf32>
    %4 = vector.broadcast %1 : vector<1x32xf32> to vector<8x32xf32>
    %5 = arith.addf %3, %4 : vector<8x32xf32>
    %6 = math.tanh %5 : vector<8x32xf32>
    %c0_5 = arith.constant 0 : index
    %c0_6 = arith.constant 0 : index
    %7 = vector.load %arg2[%c0_5, %c0_6] : memref<8x64xf32, #tpu.memory_space<vmem>>, vector<8x64xf32>
    %cst_7 = arith.constant dense<0.000000e+00> : vector<8x32xf32>
    %8 = tpu.matmul %7, %0, %cst_7 {dimension_numbers = #tpu.dot_dimension_numbers<[1], [0], [0], [1], [0, 0, 1, 1], [], []>} : vector<8x64xf32>, vector<64x32xf32>, vector<8x32xf32> -> vector<8x32xf32>
    %9 = vector.broadcast %1 : vector<1x32xf32> to vector<8x32xf32>
    %10 = arith.addf %8, %9 : vector<8x32xf32>
    %11 = math.tanh %10 : vector<8x32xf32>
    %12 = tpu.concatenate %6, %11 in 1 : vector<8x32xf32>, vector<8x32xf32> -> vector<8x64xf32>
    %c0_8 = arith.constant 0 : index
    %c0_9 = arith.constant 0 : index
    %13 = vector.load %arg5[%c0_8, %c0_9] : memref<8x64xf32, #tpu.memory_space<vmem>>, vector<8x64xf32>
    tpu.vector_store %arg5[%c0_8, %c0_9], %12 {strides = array<i32>} : memref<8x64xf32, #tpu.memory_space<vmem>>, vector<8x64xf32>,
    %14 = arith.mulf %6, %11 : vector<8x32xf32>
    %cst_10 = arith.constant dense<0.000000e+00> : vector<8xf32>
    %15 = vector.multi_reduction <add>, %14, %cst_10 [1] : vector<8x32xf32> to vector<8xf32>
    %16 = arith.negf %15 : vector<8xf32>
    %17 = math.exp %16 : vector<8xf32>
    %cst_11 = arith.constant 1.000000e+00 : f32
    %18 = vector.broadcast %cst_11 : f32 to vector<8xf32>
    %19 = arith.addf %18, %17 : vector<8xf32>
    %20 = arith.divf %18, %19 : vector<8xf32>
    %21 = vector.shape_cast %15 : vector<8xf32> to vector<1x8xf32>
    %22 = vector.shape_cast %20 : vector<8xf32> to vector<1x8xf32>
    %23 = tpu.concatenate %21, %22 in 0 : vector<1x8xf32>, vector<1x8xf32> -> vector<2x8xf32>
    %c0_12 = arith.constant 0 : index
    %c0_13 = arith.constant 0 : index
    %24 = vector.load %arg6[%c0_12, %c0_13] : memref<2x8xf32, #tpu.memory_space<vmem>>, vector<2x8xf32>
    tpu.vector_store %arg6[%c0_12, %c0_13], %23 {strides = array<i32>} : memref<2x8xf32, #tpu.memory_space<vmem>>, vector<2x8xf32>,
    return
  }
  func.func @transform_0(%arg0: i32) -> (i32, i32) {
    %c0_i32 = arith.constant 0 : i32
    %c0_i32_0 = arith.constant 0 : i32
    return %arg0, %c0_i32 : i32, i32
  }
  func.func @transform_1(%arg0: i32) -> (i32, i32) {
    %c0_i32 = arith.constant 0 : i32
    %c0_i32_0 = arith.constant 0 : i32
    return %arg0, %c0_i32 : i32, i32
  }
  func.func @transform_2(%arg0: i32) -> (i32, i32) {
    %c0_i32 = arith.constant 0 : i32
    %c0_i32_0 = arith.constant 0 : i32
    %c0_i32_1 = arith.constant 0 : i32
    return %c0_i32, %c0_i32_0 : i32, i32
  }
  func.func @transform_3(%arg0: i32) -> (i32, i32) {
    %c0_i32 = arith.constant 0 : i32
    %c0_i32_0 = arith.constant 0 : i32
    %c0_i32_1 = arith.constant 0 : i32
    return %c0_i32, %c0_i32_0 : i32, i32
  }
  func.func @transform_4(%arg0: i32) -> (i32, i32) {
    %c0_i32 = arith.constant 0 : i32
    %c0_i32_0 = arith.constant 0 : i32
    return %arg0, %c0_i32 : i32, i32
  }
  func.func @transform_5(%arg0: i32) -> (i32, i32) {
    %c0_i32 = arith.constant 0 : i32
    %c0_i32_0 = arith.constant 0 : i32
    return %c0_i32, %arg0 : i32, i32
  }
}

</mosaic_0001>

<llo_original>
// kernel: vecsim_classification_head.1
$region0: #{vecsim_classification_head.1}
  #allocation0 [shape = 'u32[]', space=smem, size = 0x4, offset = 0x4, fixed_abs, tag = 'smem constant byte address 0x4 - core index']
  #allocation1 [shape = 'u32[72,128]{1,0:T(1,128)}', space=vmem, size = 0x9000, scoped, tag = 'internal scratch']
  %s0 = inlined_call_operand.vmem [shape: f32[8,64], index: 0, kind: input, shape index: {}]
  %s1 = inlined_call_operand.vmem [shape: f32[8,64], index: 1, kind: input, shape index: {}]
  %s2 = inlined_call_operand.vmem [shape: f32[64,32], index: 2, kind: input, shape index: {}]
  %s3 = inlined_call_operand.vmem [shape: f32[1,32], index: 3, kind: input, shape index: {}]
  %s4 = inlined_call_operand.vmem [shape: f32[8,64], index: 4, kind: output, shape index: {0}]
  %s5 = inlined_call_operand.vmem [shape: f32[2,8], index: 5, kind: output, shape index: {1}]
  %6 = xla_tuple %s4, %s5
  %s7 = sld [smem:[#allocation0]]
  $region34: #{vecsim_classification_head.1} parent=0
    _
  %s9 = ssub.s32 1, %s7
  %s10 = scalar_select 0, %s9, %s7
  // Predicated region
  $region2: #{vecsim_classification_head.1} parent=0 // pred_check
    _
  $region3: #{vecsim_classification_head.1} parent=0 // pred_check_branch
    %12 = sbr.rel (0) target = $region5
  $region4: #{vecsim_classification_head.1} parent=0 // pred_region
    _
  $region5: #{vecsim_classification_head.1} parent=0 // pred_fallthru
    _
  // Predicated region
  $region6: #{vecsim_classification_head.1} parent=0 // pred_check
    _
  $region7: #{vecsim_classification_head.1} parent=0 // pred_check_branch
    %14 = sbr.rel (0) target = $region9
  $region8: #{vecsim_classification_head.1} parent=0 // pred_region
    _
  $region9: #{vecsim_classification_head.1} parent=0 // pred_fallthru
    _
  // Predicated region
  $region10: #{vecsim_classification_head.1} parent=0 // pred_check
    _
  $region11: #{vecsim_classification_head.1} parent=0 // pred_check_branch
    %16 = sbr.rel (0) target = $region13
  $region12: #{vecsim_classification_head.1} parent=0 // pred_region
    _
  $region13: #{vecsim_classification_head.1} parent=0 // pred_fallthru
    _
  // Predicated region
  $region14: #{vecsim_classification_head.1} parent=0 // pred_check
    _
  $region15: #{vecsim_classification_head.1} parent=0 // pred_check_branch
    %18 = sbr.rel (0) target = $region17
  $region16: #{vecsim_classification_head.1} parent=0 // pred_region
    _
  $region17: #{vecsim_classification_head.1} parent=0 // pred_fallthru
    _
  %v19 = vld [vmem:[%s2] sm:$0xff]
  %v20 = vld [vmem:[%s2 + $0x8] sm:$0xff]
  %v21 = vld [vmem:[%s2 + $0x10] sm:$0xff]
  %v22 = vld [vmem:[%s2 + $0x18] sm:$0xff]
  %v23 = vld [vmem:[%s2 + $0x20] sm:$0xff]
  %v24 = vld [vmem:[%s2 + $0x28] sm:$0xff]
  %v25 = vld [vmem:[%s2 + $0x30] sm:$0xff]
  %v26 = vld [vmem:[%s2 + $0x38] sm:$0xff]
  %v27 = vld [vmem:[%s3] sm:$0x1]
  %v28 = vld [vmem:[%s0] sm:$0xff]
  %v30 = vperm.slane %v27, 0
  %vm32 = vcmask 523264
  %v34 = vsel %vm32, %v28, 0
  %36 = vmatpush.msra.mxu0 0.0
  %37 = vmatpush.msra.mxu0 0.0
  %38 = vmatpush.msra.mxu0 0.0
  %39 = vmatpush.msra.mxu0 0.0
  %40 = vmatpush.msra.mxu0 0.0
  %41 = vmatpush.msra.mxu0 0.0
  %42 = vmatpush.msra.mxu0 0.0
  %43 = vmatpush.msra.mxu0 0.0
  %44 = vmatpush.msra.mxu0 %v26
  %45 = vmatpush.msra.mxu0 %v25
  %46 = vmatpush.msra.mxu0 %v24
  %47 = vmatpush.msra.mxu0 %v23
  %48 = vmatpush.msra.mxu0 %v22
  %49 = vmatpush.msra.mxu0 %v21
  %50 = vmatpush.msra.mxu0 %v20
  %51 = vmatpush.msra.mxu0 %v19
  %52 = vmatmul.f32.gmra.mxu0 %v34
  %v53 = vpop.f32.mrf.mxu0
  %v54 = vadd.f32 %v30, %v53
  %55 = vdwg.mxu0
  %v56 = vtanh.pop %v54
  %v57 = vld [vmem:[%s1] sm:$0xff]
  %v59 = vsel %vm32, %v57, 0
  %61 = vmatpush.msra.mxu0 0.0
  %62 = vmatpush.msra.mxu0 0.0
  %63 = vmatpush.msra.mxu0 0.0
  %64 = vmatpush.msra.mxu0 0.0
  %65 = vmatpush.msra.mxu0 0.0
  %66 = vmatpush.msra.mxu0 0.0
  %67 = vmatpush.msra.mxu0 0.0
  %68 = vmatpush.msra.mxu0 0.0
  %69 = vmatpush.msra.mxu0 %v26
  %70 = vmatpush.msra.mxu0 %v25
  %71 = vmatpush.msra.mxu0 %v24
  %72 = vmatpush.msra.mxu0 %v23
  %73 = vmatpush.msra.mxu0 %v22
  %74 = vmatpush.msra.mxu0 %v21
  %75 = vmatpush.msra.mxu0 %v20
  %76 = vmatpush.msra.mxu0 %v19
  %77 = vmatmul.f32.gmra.mxu0 %v59
  %v78 = vpop.f32.mrf.mxu0
  %v79 = vadd.f32 %v30, %v78
  %80 = vdwg.mxu0
  %v81 = vtanh.pop %v79
  %83 = vrot.lane.b32.xlu0 %v81, 32
  %v84 = vpop.permute.xlu0 %83
  %vm86 = vcmask 261120
  %v87 = vsel %vm86, %v56, %v84
  %88 = vst.msk [vmem:[%s4] sm:$0xff] %vm32, %v87
  %v89 = vmul.f32 %v56, %v81
  %v90 = vsel %vm86, %v89, 0.0
  %91 = vadd.xlane.f32.xlu0 %v90
  %v92 = vpop.xlane.xlu0 %91
  %v93 = vxor.u32 %v92, 2147483648
  %v94 = vmul.f32 %v93, 1.442695
  %v95 = vpow.pop %v94
  %v96 = vadd.f32 %v95, 1.0
  %v97 = vrcp.pop %v96
  %v98 = vmul.f32 %v96, %v97
  %v99 = vsub.f32 1.0, %v98
  %v100 = vmul.f32 %v97, %v99
  %v101 = vadd.f32 %v97, %v100
  %vm102 = vweird.f32 %v96
  %vm103 = vweird.f32 %v97
  %vm104 = vmor %vm102, %vm103
  %v105 = vsel %vm104, %v97, %v101
  %v106 = vand.u32 2147483647, %v96
  %vm107 = vcmp.eq.f32.partialorder %v106, 8.507059e+37
  %v108 = vand.u32 %v96, 2147483648
  %v109 = vor.u32 1.1754944e-38, %v108
  %v110 = vsel %vm107, %v109, %v105
  %v111 = vmul.f32 1.0, %v110
  %v113 = vlaneseq
  %v114 = vand.u32 %v113, 127
  %v115 = vperm.slane %v92, %v114
  %v118 = vperm.slane %v111, %v114
  %vm120 = vcmask 1040384
  %v121 = vsel %vm120, %v115, %v118
  %vm122 = vcmask 58368
  %123 = vst.msk [vmem:[%s5] sm:$0x3] %vm122, %v121
  // Predicated region
  $region18: #{vecsim_classification_head.1} parent=0 // pred_check
    _
  $region19: #{vecsim_classification_head.1} parent=0 // pred_check_branch
    %125 = sbr.rel (0) target = $region21
  $region20: #{vecsim_classification_head.1} parent=0 // pred_region
    _
  $region21: #{vecsim_classification_head.1} parent=0 // pred_fallthru
    _
  // Predicated region
  $region22: #{vecsim_classification_head.1} parent=0 // pred_check
    _
  $region23: #{vecsim_classification_head.1} parent=0 // pred_check_branch
    %127 = sbr.rel (0) target = $region25
  $region24: #{vecsim_classification_head.1} parent=0 // pred_region
    _
  $region25: #{vecsim_classification_head.1} parent=0 // pred_fallthru
    _
  // Predicated region
  $region26: #{vecsim_classification_head.1} parent=0 // pred_check
    _
  $region27: #{vecsim_classification_head.1} parent=0 // pred_check_branch
    %129 = sbr.rel (0) target = $region29
  $region28: #{vecsim_classification_head.1} parent=0 // pred_region
    _
  $region29: #{vecsim_classification_head.1} parent=0 // pred_fallthru
    _
  // Predicated region
  $region30: #{vecsim_classification_head.1} parent=0 // pred_check
    _
  $region31: #{vecsim_classification_head.1} parent=0 // pred_check_branch
    %131 = sbr.rel (0) target = $region33
  $region32: #{vecsim_classification_head.1} parent=0 // pred_region
    _
  $region33: #{vecsim_classification_head.1} parent=0 // pred_fallthru
    _

</llo_original>
